<compile_context>
chip_gen: v5e
topology: v5e:2x2
jax: 0.10.0
libtpu: 0.0.40
codegen_flags: <defaults>
</compile_context>

<pallas_src>
import functools

import jax
import jax.numpy as jnp
import numpy as np
from jax.experimental import pallas as pl
from jax.experimental.pallas import tpu as pltpu

NUM_LAYERS = 8
Z_LAYER = 3            # encoder output is the activation after layer index 3 (conv_4)
LEAKY_SLOPE = 0.1
BN_EPS = 1e-5


def _round_up(x, m):
    return (x + m - 1) // m * m


def _make_vae_chain_kernel(dims, cmax):
    """Kernel for one [*, Mtile] lane tile of positions.

    refs: x_ref  (Cin, Mt)        channels-major input tile (lane = positions)
          wt_ref (L, cmax, cmax)  packed folded weights, W'[l] = (W_l * s_l)^T
          tc_ref (L, cmax, 1)     packed shifts (conv bias + BN), column form
          z_ref  (latch, Mt)      encoder-output tile (channels-major)
          xh_ref (Cin, Mt)        decoder-output tile (channels-major)
    """
    num_layers = len(dims)
    cin0 = dims[0][0]
    latch = dims[Z_LAYER][1]
    cout_last = dims[-1][1]

    def kernel(x_ref, wt_ref, tc_ref, z_ref, xh_ref):
        h = x_ref[...].astype(jnp.float32)                      # [Cin, Mt] lane-dense
        for li in range(num_layers):
            # Layer 0 contracts over the true Cin; all later layers are a
            # uniform full [cmax, cmax] matmul (zero-padded rows stay zero).
            w = wt_ref[0, :, :cin0] if li == 0 else wt_ref[li]
            y = jnp.dot(w, h, preferred_element_type=jnp.float32)    # MXU
            y = y + tc_ref[li]                                  # folded bias + BN shift
            h = jnp.maximum(y, LEAKY_SLOPE * y)                 # LeakyReLU(0.1)
            if li == Z_LAYER:
                z_ref[...] = h[:latch, :].astype(z_ref.dtype)   # encoder output
        xh_ref[...] = h[:cout_last, :].astype(xh_ref.dtype)     # decoder output
    return kernel


def pack_params(layer_params):
    """Host-side, call ONCE: fold BN scale into conv weights, pack into slabs."""
    dims = tuple((w.shape[0], w.shape[1]) for (w, _, _) in layer_params)
    cmax = max(max(ci, co) for ci, co in dims)
    num_layers = len(layer_params)
    wt_slab = np.zeros((num_layers, cmax, cmax), np.float32)
    tc_slab = np.zeros((num_layers, cmax, 1), np.float32)
    for li, (w, s, t) in enumerate(layer_params):
        cin, cout = w.shape
        w_folded = np.asarray(w, np.float32) * np.asarray(s, np.float32).reshape(1, cout)
        wt_slab[li, :cout, :cin] = w_folded.T                   # store (W*s)^T [Cout, Cin]
        tc_slab[li, :cout, 0] = np.asarray(t, np.float32).reshape(cout)
    return jnp.asarray(wt_slab), jnp.asarray(tc_slab), dims


@functools.partial(jax.jit, static_argnames=("dims", "n_tile"))
def feature_extract_vae_forward(x, wt_slab, tc_slab, *, dims, n_tile=2048):
    """Jitted Pallas forward of FeatureExtractVAEModule.

    x: [B, N, inchannel] float32 (num_points N, particle attributes inchannel)
    wt_slab / tc_slab: pre-packed device-resident slabs from pack_params().
    dims: static tuple of (Cin, Cout) per layer.
    returns (x_hat [B, N, inchannel], z [B, latchannel, N]) -- matches PyTorch.
    """
    B, N, cin = x.shape
    assert dims[0][0] == cin and dims[-1][1] == cin
    num_layers, cmax, _ = wt_slab.shape
    latch = dims[Z_LAYER][1]

    # Fold batch into the lane axis: positions m = b*N + n.
    M = B * N
    m_tiles = pl.cdiv(M, 128)
    tile_units = max(1, min(n_tile // 128, m_tiles))
    if m_tiles >= 2:
        # Keep at least 2 "parallel" grid steps so both v7x TensorCores get work.
        tile_units = min(tile_units, (m_tiles + 1) // 2)
    mt = tile_units * 128
    grid = (pl.cdiv(M, mt),)          # ragged tail handled by Pallas masking

    x_flat = x.reshape(M, cin).T.astype(jnp.float32)            # [Cin, M] lane-dense

    kernel = _make_vae_chain_kernel(dims, cmax)

    z_flat, xh_flat = pl.pallas_call(
        kernel,
        out_shape=(
            jax.ShapeDtypeStruct((latch, M), jnp.float32),
            jax.ShapeDtypeStruct((cin, M), jnp.float32),
        ),
        grid_spec=pltpu.PrefetchScalarGridSpec(
            num_scalar_prefetch=0,
            grid=grid,
            in_specs=[
                pl.BlockSpec((cin, mt), lambda j: (0, j)),
                pl.BlockSpec((num_layers, cmax, cmax), lambda j: (0, 0, 0)),
                pl.BlockSpec((num_layers, cmax, 1), lambda j: (0, 0, 0)),
            ],
            out_specs=(
                pl.BlockSpec((latch, mt), lambda j: (0, j)),
                pl.BlockSpec((cin, mt), lambda j: (0, j)),
            ),
        ),
        compiler_params=pltpu.CompilerParams(
            dimension_semantics=("parallel",),
        ),
    )(x_flat, wt_slab, tc_slab)

    # Tiny layout transposes back to PyTorch shapes (lane axis stays dense).
    z = z_flat.reshape(latch, B, N).transpose(1, 0, 2)           # [B, latch, N]
    x_hat = xh_flat.reshape(cin, B, N).transpose(1, 2, 0)        # [B, N, Cin]
    return x_hat, z


def make_params(key, inchannel, latchannel, hchannel):
    """Deterministic synthetic parameters for the 8 layers.

    Each layer: conv weight (Cin, Cout), conv bias (Cout,), and eval-mode
    BatchNorm (gamma, beta, running_mean, running_var) folded into
    scale = gamma / sqrt(var + eps), shift = (bias - mean) * scale + beta.
    """
    dims = [
        (inchannel, hchannel),        # conv_1
        (hchannel, hchannel * 2),     # conv_2
        (hchannel * 2, hchannel),     # conv_3
        (hchannel, latchannel),       # conv_4
        (latchannel, hchannel),       # deconv_1
        (hchannel, hchannel * 2),     # deconv_2
        (hchannel * 2, hchannel),     # deconv_3
        (hchannel, inchannel),        # deconv_4
    ]
    params = []
    for (cin, cout) in dims:
        key, k_w, k_b, k_g, k_be, k_m, k_v = jax.random.split(key, 7)
        w = jax.random.normal(k_w, (cin, cout), jnp.float32) * 0.2
        b = jax.random.normal(k_b, (cout,), jnp.float32) * 0.1
        gamma = 1.0 + 0.1 * jax.random.normal(k_g, (cout,), jnp.float32)
        beta = 0.1 * jax.random.normal(k_be, (cout,), jnp.float32)
        mean = 0.1 * jax.random.normal(k_m, (cout,), jnp.float32)
        var = jnp.abs(jax.random.normal(k_v, (cout,), jnp.float32)) + 0.5
        scale = gamma / jnp.sqrt(var + BN_EPS)
        shift = (b - mean) * scale + beta
        params.append((w, scale.reshape(1, cout), shift.reshape(1, cout)))
    return params


def reference_forward(x, layer_params):
    """Pure-JAX reference of the same math (for correctness check)."""
    B, N, Cin = x.shape
    h = x.reshape(B * N, Cin).astype(jnp.float32)
    z2 = None
    for li, (w, s, t) in enumerate(layer_params):
        y = jnp.dot(h, w, precision=jax.lax.Precision.HIGHEST) * s + t
        h = jnp.where(y > 0, y, LEAKY_SLOPE * y)
        if li == Z_LAYER:
            z2 = h
    latch = z2.shape[1]
    z = z2.reshape(B, N, latch).transpose(0, 2, 1)
    x_hat = h.reshape(B, N, Cin)
    return x_hat, z


if __name__ == "__main__":
    # Shapes consistent with the module: inchannel=4 particle attributes,
    # hchannel=8, latchannel=4, num_points N=256, batch B=2.  ddim is unused by
    # forward() (enc_mu / enc_var are never called).
    B, N = 2, 256
    inchannel, latchannel, hchannel = 4, 4, 8

    key = jax.random.PRNGKey(0)
    k_x, k_p = jax.random.split(key)
    x = jax.random.normal(k_x, (B, N, inchannel), jnp.float32)
    params = make_params(k_p, inchannel, latchannel, hchannel)

    # Pack params once (host side), then call the jitted forward with the
    # device-resident slabs.
    wt_slab, tc_slab, dims = pack_params(params)

    x_hat, z = feature_extract_vae_forward(x, wt_slab, tc_slab,
                                           dims=dims, n_tile=2048)
    x_hat = jax.block_until_ready(x_hat)
    z = jax.block_until_ready(z)

    x_hat_ref, z_ref = reference_forward(x, params)
    np.testing.assert_allclose(np.asarray(x_hat), np.asarray(x_hat_ref),
                               rtol=1e-4, atol=1e-4)
    np.testing.assert_allclose(np.asarray(z), np.asarray(z_ref),
                               rtol=1e-4, atol=1e-4)

    assert x_hat.shape == (B, N, inchannel)
    assert z.shape == (B, latchannel, N)
    print("KERNEL_OK")
</pallas_src>

<mosaic_0001>
module attributes {stable_mosaic.version = 11 : i64} {
  func.func @kernel(%arg0: i32, %arg1: memref<4x256xf32, #tpu.memory_space<vmem>>, %arg2: memref<8x16x16xf32, #tpu.memory_space<vmem>>, %arg3: memref<8x16x1xf32, #tpu.memory_space<vmem>>, %arg4: memref<4x256xf32, #tpu.memory_space<vmem>>, %arg5: memref<4x256xf32, #tpu.memory_space<vmem>>) attributes {dimension_semantics = [#tpu.dimension_semantics<parallel>], iteration_bounds = array<i64: 2>, scalar_prefetch = 0 : i64, scratch_operands = 0 : i64, tpu.core_type = #tpu.core_type<tc>, window_params = [{transform_indices = @transform_0, window_bounds = array<i64: 4, 256>}, {pipeline_mode = #tpu.pipeline_mode<synchronous>, transform_indices = @transform_1, window_bounds = array<i64: 8, 16, 16>}, {pipeline_mode = #tpu.pipeline_mode<synchronous>, transform_indices = @transform_2, window_bounds = array<i64: 8, 16, 1>}, {transform_indices = @transform_3, window_bounds = array<i64: 4, 256>}, {transform_indices = @transform_4, window_bounds = array<i64: 4, 256>}]} {
    %c0 = arith.constant 0 : index
    %c0_0 = arith.constant 0 : index
    %0 = vector.load %arg1[%c0, %c0_0] : memref<4x256xf32, #tpu.memory_space<vmem>>, vector<4x256xf32>
    %c0_1 = arith.constant 0 : index
    %c0_2 = arith.constant 0 : index
    %c0_3 = arith.constant 0 : index
    %1 = vector.load %arg2[%c0_1, %c0_2, %c0_3] : memref<8x16x16xf32, #tpu.memory_space<vmem>>, vector<1x16x4xf32>
    %2 = vector.shape_cast %1 : vector<1x16x4xf32> to vector<16x4xf32>
    %cst = arith.constant dense<0.000000e+00> : vector<16x256xf32>
    %3 = tpu.matmul %2, %0, %cst {dimension_numbers = #tpu.dot_dimension_numbers<[1], [0], [0], [1], [0, 0, 1, 1], [], []>} : vector<16x4xf32>, vector<4x256xf32>, vector<16x256xf32> -> vector<16x256xf32>
    %c0_4 = arith.constant 0 : index
    %c0_5 = arith.constant 0 : index
    %c0_6 = arith.constant 0 : index
    %4 = vector.load %arg3[%c0_4, %c0_5, %c0_6] : memref<8x16x1xf32, #tpu.memory_space<vmem>>, vector<1x16x1xf32>
    %5 = vector.shape_cast %4 : vector<1x16x1xf32> to vector<16x1xf32>
    %6 = vector.broadcast %5 : vector<16x1xf32> to vector<16x256xf32>
    %7 = arith.addf %3, %6 : vector<16x256xf32>
    %cst_7 = arith.constant 1.000000e-01 : f32
    %8 = vector.broadcast %cst_7 : f32 to vector<16x256xf32>
    %9 = arith.mulf %8, %7 : vector<16x256xf32>
    %10 = arith.maximumf %7, %9 : vector<16x256xf32>
    %c1 = arith.constant 1 : index
    %c0_8 = arith.constant 0 : index
    %c0_9 = arith.constant 0 : index
    %11 = vector.load %arg2[%c1, %c0_8, %c0_9] : memref<8x16x16xf32, #tpu.memory_space<vmem>>, vector<1x16x16xf32>
    %12 = vector.shape_cast %11 : vector<1x16x16xf32> to vector<16x16xf32>
    %cst_10 = arith.constant dense<0.000000e+00> : vector<16x256xf32>
    %13 = tpu.matmul %12, %10, %cst_10 {dimension_numbers = #tpu.dot_dimension_numbers<[1], [0], [0], [1], [0, 0, 1, 1], [], []>} : vector<16x16xf32>, vector<16x256xf32>, vector<16x256xf32> -> vector<16x256xf32>
    %c1_11 = arith.constant 1 : index
    %c0_12 = arith.constant 0 : index
    %c0_13 = arith.constant 0 : index
    %14 = vector.load %arg3[%c1_11, %c0_12, %c0_13] : memref<8x16x1xf32, #tpu.memory_space<vmem>>, vector<1x16x1xf32>
    %15 = vector.shape_cast %14 : vector<1x16x1xf32> to vector<16x1xf32>
    %16 = vector.broadcast %15 : vector<16x1xf32> to vector<16x256xf32>
    %17 = arith.addf %13, %16 : vector<16x256xf32>
    %cst_14 = arith.constant 1.000000e-01 : f32
    %18 = vector.broadcast %cst_14 : f32 to vector<16x256xf32>
    %19 = arith.mulf %18, %17 : vector<16x256xf32>
    %20 = arith.maximumf %17, %19 : vector<16x256xf32>
    %c2 = arith.constant 2 : index
    %c0_15 = arith.constant 0 : index
    %c0_16 = arith.constant 0 : index
    %21 = vector.load %arg2[%c2, %c0_15, %c0_16] : memref<8x16x16xf32, #tpu.memory_space<vmem>>, vector<1x16x16xf32>
    %22 = vector.shape_cast %21 : vector<1x16x16xf32> to vector<16x16xf32>
    %cst_17 = arith.constant dense<0.000000e+00> : vector<16x256xf32>
    %23 = tpu.matmul %22, %20, %cst_17 {dimension_numbers = #tpu.dot_dimension_numbers<[1], [0], [0], [1], [0, 0, 1, 1], [], []>} : vector<16x16xf32>, vector<16x256xf32>, vector<16x256xf32> -> vector<16x256xf32>
    %c2_18 = arith.constant 2 : index
    %c0_19 = arith.constant 0 : index
    %c0_20 = arith.constant 0 : index
    %24 = vector.load %arg3[%c2_18, %c0_19, %c0_20] : memref<8x16x1xf32, #tpu.memory_space<vmem>>, vector<1x16x1xf32>
    %25 = vector.shape_cast %24 : vector<1x16x1xf32> to vector<16x1xf32>
    %26 = vector.broadcast %25 : vector<16x1xf32> to vector<16x256xf32>
    %27 = arith.addf %23, %26 : vector<16x256xf32>
    %cst_21 = arith.constant 1.000000e-01 : f32
    %28 = vector.broadcast %cst_21 : f32 to vector<16x256xf32>
    %29 = arith.mulf %28, %27 : vector<16x256xf32>
    %30 = arith.maximumf %27, %29 : vector<16x256xf32>
    %c3 = arith.constant 3 : index
    %c0_22 = arith.constant 0 : index
    %c0_23 = arith.constant 0 : index
    %31 = vector.load %arg2[%c3, %c0_22, %c0_23] : memref<8x16x16xf32, #tpu.memory_space<vmem>>, vector<1x16x16xf32>
    %32 = vector.shape_cast %31 : vector<1x16x16xf32> to vector<16x16xf32>
    %cst_24 = arith.constant dense<0.000000e+00> : vector<16x256xf32>
    %33 = tpu.matmul %32, %30, %cst_24 {dimension_numbers = #tpu.dot_dimension_numbers<[1], [0], [0], [1], [0, 0, 1, 1], [], []>} : vector<16x16xf32>, vector<16x256xf32>, vector<16x256xf32> -> vector<16x256xf32>
    %c3_25 = arith.constant 3 : index
    %c0_26 = arith.constant 0 : index
    %c0_27 = arith.constant 0 : index
    %34 = vector.load %arg3[%c3_25, %c0_26, %c0_27] : memref<8x16x1xf32, #tpu.memory_space<vmem>>, vector<1x16x1xf32>
    %35 = vector.shape_cast %34 : vector<1x16x1xf32> to vector<16x1xf32>
    %36 = vector.broadcast %35 : vector<16x1xf32> to vector<16x256xf32>
    %37 = arith.addf %33, %36 : vector<16x256xf32>
    %cst_28 = arith.constant 1.000000e-01 : f32
    %38 = vector.broadcast %cst_28 : f32 to vector<16x256xf32>
    %39 = arith.mulf %38, %37 : vector<16x256xf32>
    %40 = arith.maximumf %37, %39 : vector<16x256xf32>
    %41 = vector.extract_strided_slice %40 {offsets = [0, 0], sizes = [4, 256], strides = [1, 1]} : vector<16x256xf32> to vector<4x256xf32>
    %c0_29 = arith.constant 0 : index
    %c0_30 = arith.constant 0 : index
    %42 = vector.load %arg4[%c0_29, %c0_30] : memref<4x256xf32, #tpu.memory_space<vmem>>, vector<4x256xf32>
    tpu.vector_store %arg4[%c0_29, %c0_30], %41 {strides = array<i32>} : memref<4x256xf32, #tpu.memory_space<vmem>>, vector<4x256xf32>,
    %c4 = arith.constant 4 : index
    %c0_31 = arith.constant 0 : index
    %c0_32 = arith.constant 0 : index
    %43 = vector.load %arg2[%c4, %c0_31, %c0_32] : memref<8x16x16xf32, #tpu.memory_space<vmem>>, vector<1x16x16xf32>
    %44 = vector.shape_cast %43 : vector<1x16x16xf32> to vector<16x16xf32>
    %cst_33 = arith.constant dense<0.000000e+00> : vector<16x256xf32>
    %45 = tpu.matmul %44, %40, %cst_33 {dimension_numbers = #tpu.dot_dimension_numbers<[1], [0], [0], [1], [0, 0, 1, 1], [], []>} : vector<16x16xf32>, vector<16x256xf32>, vector<16x256xf32> -> vector<16x256xf32>
    %c4_34 = arith.constant 4 : index
    %c0_35 = arith.constant 0 : index
    %c0_36 = arith.constant 0 : index
    %46 = vector.load %arg3[%c4_34, %c0_35, %c0_36] : memref<8x16x1xf32, #tpu.memory_space<vmem>>, vector<1x16x1xf32>
    %47 = vector.shape_cast %46 : vector<1x16x1xf32> to vector<16x1xf32>
    %48 = vector.broadcast %47 : vector<16x1xf32> to vector<16x256xf32>
    %49 = arith.addf %45, %48 : vector<16x256xf32>
    %cst_37 = arith.constant 1.000000e-01 : f32
    %50 = vector.broadcast %cst_37 : f32 to vector<16x256xf32>
    %51 = arith.mulf %50, %49 : vector<16x256xf32>
    %52 = arith.maximumf %49, %51 : vector<16x256xf32>
    %c5 = arith.constant 5 : index
    %c0_38 = arith.constant 0 : index
    %c0_39 = arith.constant 0 : index
    %53 = vector.load %arg2[%c5, %c0_38, %c0_39] : memref<8x16x16xf32, #tpu.memory_space<vmem>>, vector<1x16x16xf32>
    %54 = vector.shape_cast %53 : vector<1x16x16xf32> to vector<16x16xf32>
    %cst_40 = arith.constant dense<0.000000e+00> : vector<16x256xf32>
    %55 = tpu.matmul %54, %52, %cst_40 {dimension_numbers = #tpu.dot_dimension_numbers<[1], [0], [0], [1], [0, 0, 1, 1], [], []>} : vector<16x16xf32>, vector<16x256xf32>, vector<16x256xf32> -> vector<16x256xf32>
    %c5_41 = arith.constant 5 : index
    %c0_42 = arith.constant 0 : index
    %c0_43 = arith.constant 0 : index
    %56 = vector.load %arg3[%c5_41, %c0_42, %c0_43] : memref<8x16x1xf32, #tpu.memory_space<vmem>>, vector<1x16x1xf32>
    %57 = vector.shape_cast %56 : vector<1x16x1xf32> to vector<16x1xf32>
    %58 = vector.broadcast %57 : vector<16x1xf32> to vector<16x256xf32>
    %59 = arith.addf %55, %58 : vector<16x256xf32>
    %cst_44 = arith.constant 1.000000e-01 : f32
    %60 = vector.broadcast %cst_44 : f32 to vector<16x256xf32>
    %61 = arith.mulf %60, %59 : vector<16x256xf32>
    %62 = arith.maximumf %59, %61 : vector<16x256xf32>
    %c6 = arith.constant 6 : index
    %c0_45 = arith.constant 0 : index
    %c0_46 = arith.constant 0 : index
    %63 = vector.load %arg2[%c6, %c0_45, %c0_46] : memref<8x16x16xf32, #tpu.memory_space<vmem>>, vector<1x16x16xf32>
    %64 = vector.shape_cast %63 : vector<1x16x16xf32> to vector<16x16xf32>
    %cst_47 = arith.constant dense<0.000000e+00> : vector<16x256xf32>
    %65 = tpu.matmul %64, %62, %cst_47 {dimension_numbers = #tpu.dot_dimension_numbers<[1], [0], [0], [1], [0, 0, 1, 1], [], []>} : vector<16x16xf32>, vector<16x256xf32>, vector<16x256xf32> -> vector<16x256xf32>
    %c6_48 = arith.constant 6 : index
    %c0_49 = arith.constant 0 : index
    %c0_50 = arith.constant 0 : index
    %66 = vector.load %arg3[%c6_48, %c0_49, %c0_50] : memref<8x16x1xf32, #tpu.memory_space<vmem>>, vector<1x16x1xf32>
    %67 = vector.shape_cast %66 : vector<1x16x1xf32> to vector<16x1xf32>
    %68 = vector.broadcast %67 : vector<16x1xf32> to vector<16x256xf32>
    %69 = arith.addf %65, %68 : vector<16x256xf32>
    %cst_51 = arith.constant 1.000000e-01 : f32
    %70 = vector.broadcast %cst_51 : f32 to vector<16x256xf32>
    %71 = arith.mulf %70, %69 : vector<16x256xf32>
    %72 = arith.maximumf %69, %71 : vector<16x256xf32>
    %c7 = arith.constant 7 : index
    %c0_52 = arith.constant 0 : index
    %c0_53 = arith.constant 0 : index
    %73 = vector.load %arg2[%c7, %c0_52, %c0_53] : memref<8x16x16xf32, #tpu.memory_space<vmem>>, vector<1x16x16xf32>
    %74 = vector.shape_cast %73 : vector<1x16x16xf32> to vector<16x16xf32>
    %cst_54 = arith.constant dense<0.000000e+00> : vector<16x256xf32>
    %75 = tpu.matmul %74, %72, %cst_54 {dimension_numbers = #tpu.dot_dimension_numbers<[1], [0], [0], [1], [0, 0, 1, 1], [], []>} : vector<16x16xf32>, vector<16x256xf32>, vector<16x256xf32> -> vector<16x256xf32>
    %c7_55 = arith.constant 7 : index
    %c0_56 = arith.constant 0 : index
    %c0_57 = arith.constant 0 : index
    %76 = vector.load %arg3[%c7_55, %c0_56, %c0_57] : memref<8x16x1xf32, #tpu.memory_space<vmem>>, vector<1x16x1xf32>
    %77 = vector.shape_cast %76 : vector<1x16x1xf32> to vector<16x1xf32>
    %78 = vector.broadcast %77 : vector<16x1xf32> to vector<16x256xf32>
    %79 = arith.addf %75, %78 : vector<16x256xf32>
    %cst_58 = arith.constant 1.000000e-01 : f32
    %80 = vector.broadcast %cst_58 : f32 to vector<16x256xf32>
    %81 = arith.mulf %80, %79 : vector<16x256xf32>
    %82 = arith.maximumf %79, %81 : vector<16x256xf32>
    %83 = vector.extract_strided_slice %82 {offsets = [0, 0], sizes = [4, 256], strides = [1, 1]} : vector<16x256xf32> to vector<4x256xf32>
    %c0_59 = arith.constant 0 : index
    %c0_60 = arith.constant 0 : index
    %84 = vector.load %arg5[%c0_59, %c0_60] : memref<4x256xf32, #tpu.memory_space<vmem>>, vector<4x256xf32>
    tpu.vector_store %arg5[%c0_59, %c0_60], %83 {strides = array<i32>} : memref<4x256xf32, #tpu.memory_space<vmem>>, vector<4x256xf32>,
    return
  }
  func.func @transform_0(%arg0: i32) -> (i32, i32) {
    %c0_i32 = arith.constant 0 : i32
    %c0_i32_0 = arith.constant 0 : i32
    return %c0_i32, %arg0 : i32, i32
  }
  func.func @transform_1(%arg0: i32) -> (i32, i32, i32) {
    %c0_i32 = arith.constant 0 : i32
    %c0_i32_0 = arith.constant 0 : i32
    %c0_i32_1 = arith.constant 0 : i32
    %c0_i32_2 = arith.constant 0 : i32
    return %c0_i32, %c0_i32_0, %c0_i32_1 : i32, i32, i32
  }
  func.func @transform_2(%arg0: i32) -> (i32, i32, i32) {
    %c0_i32 = arith.constant 0 : i32
    %c0_i32_0 = arith.constant 0 : i32
    %c0_i32_1 = arith.constant 0 : i32
    %c0_i32_2 = arith.constant 0 : i32
    return %c0_i32, %c0_i32_0, %c0_i32_1 : i32, i32, i32
  }
  func.func @transform_3(%arg0: i32) -> (i32, i32) {
    %c0_i32 = arith.constant 0 : i32
    %c0_i32_0 = arith.constant 0 : i32
    return %c0_i32, %arg0 : i32, i32
  }
  func.func @transform_4(%arg0: i32) -> (i32, i32) {
    %c0_i32 = arith.constant 0 : i32
    %c0_i32_0 = arith.constant 0 : i32
    return %c0_i32, %arg0 : i32, i32
  }
}

</mosaic_0001>

<llo_original>
// kernel: feature_extract_vae_forward.1
$region0: #{feature_extract_vae_forward.1}
  #allocation0 [shape = 'u32[]', space=smem, size = 0x4, offset = 0x4, fixed_abs, tag = 'smem constant byte address 0x4 - core index']
  #allocation1 [shape = 'u32[72,128]{1,0:T(1,128)}', space=vmem, size = 0x9000, scoped, tag = 'internal scratch']
  %s0 = inlined_call_operand.hbm [shape: f32[4,512], index: 0, kind: input, shape index: {}]
  %s1 = inlined_call_operand.vmem [shape: f32[8,16,16], index: 1, kind: input, shape index: {}]
  %s2 = inlined_call_operand.vmem [shape: f32[8,16,1], index: 2, kind: input, shape index: {}]
  %s3 = inlined_call_operand.hbm [shape: f32[4,512], index: 3, kind: output, shape index: {0}]
  %s4 = inlined_call_operand.hbm [shape: f32[4,512], index: 4, kind: output, shape index: {1}]
  %5 = xla_tuple %s3, %s4
  %s6 = sld [smem:[#allocation0]]
  $region57: #{feature_extract_vae_forward.1} parent=0
    _
  %s8 = ssub.s32 1, %s6
  %s9 = scalar_select 0, %s8, %s6
  $region1: #{feature_extract_vae_forward.1} parent=0
    #allocation2 [shape = 'u8[8192]{0}', space=vmem, size = 0x2000, scoped, tag = 'input window, operand 0']
    #allocation3 [shape = 's32[2]{0}', space=sflag, size = 0x8, scoped, tag = 'scoped memory for feature_extract_vae_forward.1']
    #allocation4 [shape = 's32[2]{0}', space=sflag, size = 0x8, scoped, tag = 'scoped memory for feature_extract_vae_forward.1']
    #allocation5 [shape = 'u8[8192]{0}', space=vmem, size = 0x2000, scoped, tag = 'output window, operand 0']
    #allocation6 [shape = 'u8[8192]{0}', space=vmem, size = 0x2000, scoped, tag = 'output window, operand 1']
    #allocation7 [shape = 's32[2]{0}', space=sflag, size = 0x8, scoped, tag = 'scoped memory for feature_extract_vae_forward.1']
    %10 = vsyncpa [#allocation3], 0
    %s11 = scalar_lea.sflag [#allocation3], 1
    %12 = vsyncpa %s11, 0
    %13 = vsyncpa [#allocation4], 0
    %s14 = scalar_lea.sflag [#allocation4], 1
    %15 = vsyncpa %s14, 0
    %16 = vsyncpa [#allocation7], 0
    %s17 = scalar_lea.sflag [#allocation7], 1
    %18 = vsyncpa %s17, 0
    loop: start=0, step=1, limit=4
    $region2: #{feature_extract_vae_forward.1} parent=1 // loop_pre_header
      _
    $region3: #{feature_extract_vae_forward.1} parent=1 // loop_header
      %s20 = sphi 0, %s24
      %p21 = scmp.ge.s32.totalorder %s20, 4
      %s30 = sphi 0, %s32
      %s33 = sphi 0, %s30
      %s34 = sphi 0, %s33
      %s50 = sphi 0, %s34
      %s54 = sphi 0, %s54
      %s56 = sphi 0, %s54
      %s57 = sphi 0, %s56
      %s71 = sphi 0, %s57
      %s75 = sphi 0, %s75
      %s77 = sphi 0, %s75
      %s78 = sphi 0, %s77
      %s92 = sphi 0, %s78
      %s98 = sphi 0, %s100
      %s101 = sphi 0, %s98
      %s102 = sphi 0, %s101
      %s118 = sphi 0, %s102
      %s124 = sphi 0, %s126
      %s127 = sphi 0, %s124
      %s128 = sphi 0, %s127
      %s144 = sphi 0, %s128
    $region4: #{feature_extract_vae_forward.1} parent=1 // loop_header_branch
      %23 = sbr.rel (%p21) target = $region8
    $region5: #{feature_extract_vae_forward.1} parent=1 // loop_body
      %s25 = ssub.s32 %s20, 1
      %s26 = ssub.s32 %s20, 2
      %s27 = sadd.s32 %s20, 1
      %s28 = ssub.s32 %s20, %s27
      %p29 = scmp.eq.s32.totalorder %s28, 0
      %s31 = sadd.s32 %s30, 1
      %s32 = scalar_select %p29, %s30, %s31
      %p35 = pneg %p29
      %p36 = scmp.eq.s32.totalorder %s20, 1
      %p37 = por %p35, %p36
      %p38 = scmp.ne.s32.totalorder %s30, %s33
      %p39 = scmp.eq.s32.totalorder %s20, 0
      %p40 = por %p38, %p39
      %p41 = scmp.ne.s32.totalorder %s30, %s33
      %p42 = scmp.eq.s32.totalorder %s25, 1
      %p43 = por %p41, %p42
      %p44 = scmp.ne.s32.totalorder %s33, %s34
      %p45 = scmp.eq.s32.totalorder %s25, 0
      %p46 = por %p44, %p45
      %p47 = scmp.ne.s32.totalorder %s33, %s34
      %p48 = scmp.eq.s32.totalorder %s26, 1
      %p49 = por %p47, %p48
      %p51 = scmp.ne.s32.totalorder %s34, %s50
      %p52 = scmp.eq.s32.totalorder %s26, 0
      %p53 = por %p51, %p52
      %s55 = sadd.s32 %s54, 1
      %p58 = scmp.eq.s32.totalorder %s20, 1
      %p59 = scmp.ne.s32.totalorder %s54, %s56
      %p60 = scmp.eq.s32.totalorder %s20, 0
      %p61 = por %p59, %p60
      %p62 = scmp.ne.s32.totalorder %s54, %s56
      %p63 = scmp.eq.s32.totalorder %s25, 1
      %p64 = por %p62, %p63
      %p65 = scmp.ne.s32.totalorder %s56, %s57
      %p66 = scmp.eq.s32.totalorder %s25, 0
      %p67 = por %p65, %p66
      %p68 = scmp.ne.s32.totalorder %s56, %s57
      %p69 = scmp.eq.s32.totalorder %s26, 1
      %p70 = por %p68, %p69
      %p72 = scmp.ne.s32.totalorder %s57, %s71
      %p73 = scmp.eq.s32.totalorder %s26, 0
      %p74 = por %p72, %p73
      %s76 = sadd.s32 %s75, 1
      %p79 = scmp.eq.s32.totalorder %s20, 1
      %p80 = scmp.ne.s32.totalorder %s75, %s77
      %p81 = scmp.eq.s32.totalorder %s20, 0
      %p82 = por %p80, %p81
      %p83 = scmp.ne.s32.totalorder %s75, %s77
      %p84 = scmp.eq.s32.totalorder %s25, 1
      %p85 = por %p83, %p84
      %p86 = scmp.ne.s32.totalorder %s77, %s78
      %p87 = scmp.eq.s32.totalorder %s25, 0
      %p88 = por %p86, %p87
      %p89 = scmp.ne.s32.totalorder %s77, %s78
      %p90 = scmp.eq.s32.totalorder %s26, 1
      %p91 = por %p89, %p90
      %p93 = scmp.ne.s32.totalorder %s78, %s92
      %p94 = scmp.eq.s32.totalorder %s26, 0
      %p95 = por %p93, %p94
      %s96 = ssub.s32 %s20, %s27
      %p97 = scmp.eq.s32.totalorder %s96, 0
      %s99 = sadd.s32 %s98, 1
      %s100 = scalar_select %p97, %s98, %s99
      %p103 = pneg %p97
      %p104 = scmp.eq.s32.totalorder %s20, 1
      %p105 = por %p103, %p104
      %p106 = scmp.ne.s32.totalorder %s98, %s101
      %p107 = scmp.eq.s32.totalorder %s20, 0
      %p108 = por %p106, %p107
      %p109 = scmp.ne.s32.totalorder %s98, %s101
      %p110 = scmp.eq.s32.totalorder %s25, 1
      %p111 = por %p109, %p110
      %p112 = scmp.ne.s32.totalorder %s101, %s102
      %p113 = scmp.eq.s32.totalorder %s25, 0
      %p114 = por %p112, %p113
      %p115 = scmp.ne.s32.totalorder %s101, %s102
      %p116 = scmp.eq.s32.totalorder %s26, 1
      %p117 = por %p115, %p116
      %p119 = scmp.ne.s32.totalorder %s102, %s118
      %p120 = scmp.eq.s32.totalorder %s26, 0
      %p121 = por %p119, %p120
      %s122 = ssub.s32 %s20, %s27
      %p123 = scmp.eq.s32.totalorder %s122, 0
      %s125 = sadd.s32 %s124, 1
      %s126 = scalar_select %p123, %s124, %s125
      %p129 = pneg %p123
      %p130 = scmp.eq.s32.totalorder %s20, 1
      %p131 = por %p129, %p130
      %p132 = scmp.ne.s32.totalorder %s124, %s127
      %p133 = scmp.eq.s32.totalorder %s20, 0
      %p134 = por %p132, %p133
      %p135 = scmp.ne.s32.totalorder %s124, %s127
      %p136 = scmp.eq.s32.totalorder %s25, 1
      %p137 = por %p135, %p136
      %p138 = scmp.ne.s32.totalorder %s127, %s128
      %p139 = scmp.eq.s32.totalorder %s25, 0
      %p140 = por %p138, %p139
      %p141 = scmp.ne.s32.totalorder %s127, %s128
      %p142 = scmp.eq.s32.totalorder %s26, 1
      %p143 = por %p141, %p142
      %p145 = scmp.ne.s32.totalorder %s128, %s144
      %p146 = scmp.eq.s32.totalorder %s26, 0
      %p147 = por %p145, %p146
      %p148 = scmp.le.s32.totalorder 1, %s20
      %p149 = scmp.lt.s32.totalorder %s20, 3
      %p150 = pnand %p148, %p149
      %p151 = pneg %p150
      // Predicated region
      $region9: #{feature_extract_vae_forward.1} parent=5 // pred_check
        _
      $region10: #{feature_extract_vae_forward.1} parent=5 // pred_check_branch
        %153 = sbr.rel (%p150) target = $region12
      $region11: #{feature_extract_vae_forward.1} parent=5 // pred_region
        %s154 = ssub.s32 %s20, 1
        // Predicated region
        $region13: #{feature_extract_vae_forward.1} parent=11 // pred_check
          %p155 = pneg %p67
        $region14: #{feature_extract_vae_forward.1} parent=11 // pred_check_branch
          %157 = sbr.rel (%p155) target = $region16
        $region15: #{feature_extract_vae_forward.1} parent=11 // pred_region
          _
        $region16: #{feature_extract_vae_forward.1} parent=11 // pred_fallthru
          _
        // Predicated region
        $region17: #{feature_extract_vae_forward.1} parent=11 // pred_check
          %p158 = pneg %p88
        $region18: #{feature_extract_vae_forward.1} parent=11 // pred_check_branch
          %160 = sbr.rel (%p158) target = $region20
        $region19: #{feature_extract_vae_forward.1} parent=11 // pred_region
          _
        $region20: #{feature_extract_vae_forward.1} parent=11 // pred_fallthru
          _
      $region12: #{feature_extract_vae_forward.1} parent=5 // pred_fallthru
        _
      %p161 = scmp.lt.s32.totalorder %s20, 2
      // Predicated region
      $region21: #{feature_extract_vae_forward.1} parent=5 // pred_check
        %p162 = pneg %p161
      $region22: #{feature_extract_vae_forward.1} parent=5 // pred_check_branch
        %164 = sbr.rel (%p162) target = $region24
      $region23: #{feature_extract_vae_forward.1} parent=5 // pred_region
        // Predicated region
        $region25: #{feature_extract_vae_forward.1} parent=23 // pred_check
          %p165 = pneg %p40
        $region26: #{feature_extract_vae_forward.1} parent=23 // pred_check_branch
          %167 = sbr.rel (%p165) target = $region28
        $region27: #{feature_extract_vae_forward.1} parent=23 // pred_region
          %s168 = sand.u32 %s30, 1
          %s169 = scalar_lea.sflag [#allocation3], %s168
          %s170 = sand.u32 %s30, 1
          %s171 = smul.addr %s170, 8
          %s172 = scalar_lea.vmem [#allocation2], %s171
          %s173 = smul.u32 2, %s20
          %175 = vsyncadd %s169, 0
          %s176 = smul.addr %s173, 4
          %s177 = scalar_lea.hbm %s0, %s176
          %s179 = sshll.u32 %s177, 4
          %s180 = int_to_ptr.hbm [resolvable:$true] %s179
          %s181 = sshll.u32 %s172, 4
          %s182 = int_to_ptr.vmem [resolvable:$true] %s181
          %184 = dma.hbm_to_vmem [thread:$0]  %s180, 128, %s182, %s169
        $region28: #{feature_extract_vae_forward.1} parent=23 // pred_fallthru
          _
      $region24: #{feature_extract_vae_forward.1} parent=5 // pred_fallthru
        _
      %p185 = scmp.le.s32.totalorder 1, %s20
      %p186 = scmp.lt.s32.totalorder %s20, 3
      %p187 = pnand %p185, %p186
      %p188 = pneg %p187
      // Predicated region
      $region29: #{feature_extract_vae_forward.1} parent=5 // pred_check
        _
      $region30: #{feature_extract_vae_forward.1} parent=5 // pred_check_branch
        %190 = sbr.rel (%p187) target = $region32
      $region31: #{feature_extract_vae_forward.1} parent=5 // pred_region
        %s191 = ssub.s32 %s20, 1
        %s192 = sand.u32 %s33, 1
        %s193 = scalar_lea.sflag [#allocation3], %s192
        %s194 = sand.u32 %s33, 1
        %s195 = smul.addr %s194, 8
        %s196 = scalar_lea.vmem [#allocation2], %s195
        // Predicated region
        $region33: #{feature_extract_vae_forward.1} parent=31 // pred_check
          %p197 = pneg %p46
        $region34: #{feature_extract_vae_forward.1} parent=31 // pred_check_branch
          %199 = sbr.rel (%p197) target = $region36
        $region35: #{feature_extract_vae_forward.1} parent=31 // pred_region
          %201 = dma.done %s193, 128
        $region36: #{feature_extract_vae_forward.1} parent=31 // pred_fallthru
          _
        %s202 = sand.u32 %s33, 1
        %s203 = scalar_lea.sflag [#allocation3], %s202
        %s204 = sand.u32 %s33, 1
        %s205 = smul.addr %s204, 8
        %s206 = scalar_lea.vmem [#allocation2], %s205
        %p207 = pneg %p46
        %p208 = pneg %p43
        %p209 = pneg %p67
        %p210 = pneg %p64
        %p211 = pneg %p88
        %p212 = pneg %p85
        %p213 = pneg %p114
        %p214 = pneg %p111
        %s215 = sand.u32 %s101, 1
        %s216 = scalar_lea.sflag [#allocation4], %s215
        %s217 = sand.u32 %s101, 1
        %s218 = smul.addr %s217, 8
        %s219 = scalar_lea.vmem [#allocation5], %s218
        %p220 = pneg %p140
        %p221 = pneg %p137
        %s222 = sand.u32 %s127, 1
        %s223 = scalar_lea.sflag [#allocation7], %s222
        %s224 = sand.u32 %s127, 1
        %s225 = smul.addr %s224, 8
        %s226 = scalar_lea.vmem [#allocation6], %s225
        %s227 = smul.u32 2, %s25
        %s228 = smul.u32 2, %s25
        %s229 = smul.u32 2, %s25
        %v230 = vld [vmem:[%s196] sm:$0xff]
        %v231 = vld [vmem:[%s1] sm:$0xff]
        %v232 = vld [vmem:[%s1 + $0x8] sm:$0xff]
        %v233 = vld [vmem:[%s2] sm:$0xff]
        %v234 = vld [vmem:[%s2 + $0x8] sm:$0xff]
        %236 = vset.pattern.permute.xlu0 0
        %237 = vperm.xlu0 %236, %v233
        %v238 = vpop.permute.xlu0 %237
        %241 = vset.pattern.permute.xlu0 0
        %242 = vperm.xlu0 %241, %v234
        %v243 = vpop.permute.xlu0 %242
        %246 = vst [vmem:[#allocation1] ss:$2 sm:$0xff] %v230
        %v247 = vld.sshfl [vmem:[#allocation1] sm:$0xff pattern:$0x75316420]
        %v248 = vld.sshfl [vmem:[#allocation1 + $0x8] sm:$0xff pattern:$0x75316420]
        %vm249 = vcmask 31744
        %v251 = vsel %vm249, %v231, 0
        %v254 = vsel %vm249, %v232, 0
        %vm256 = vcmask 1043456
        %v257 = vsel %vm256, %v247, 0
        %v259 = vsel %vm256, %v248, 0
        %261 = vmatpush.msra.mxu0 0.0
        %262 = vmatpush.msra.mxu0 0.0
        %263 = vmatpush.msra.mxu0 0.0
        %264 = vmatpush.msra.mxu0 0.0
        %265 = vmatpush.msra.mxu0 0.0
        %266 = vmatpush.msra.mxu0 0.0
        %267 = vmatpush.msra.mxu0 0.0
        %268 = vmatpush.msra.mxu0 0.0
        %269 = vmatpush.msra.mxu0 0.0
        %270 = vmatpush.msra.mxu0 0.0
        %271 = vmatpush.msra.mxu0 0.0
        %272 = vmatpush.msra.mxu0 0.0
        %273 = vmatpush.msra.mxu0 0.0
        %274 = vmatpush.msra.mxu0 0.0
        %275 = vmatpush.msra.mxu0 0.0
        %276 = vmatpush.msra.mxu0 %v257
        %277 = vmatmul.f32.gmra.mxu0 %v251
        %v278 = vpop.f32.mrf.mxu0
        %v279 = vadd.f32 %v238, %v278
        %280 = vmatmul.f32.gmra.mxu0 %v254
        %v281 = vpop.f32.mrf.mxu0
        %v282 = vadd.f32 %v243, %v281
        %283 = vdwg.mxu0
        %284 = vmatpush.msra.mxu0 0.0
        %285 = vmatpush.msra.mxu0 0.0
        %286 = vmatpush.msra.mxu0 0.0
        %287 = vmatpush.msra.mxu0 0.0
        %288 = vmatpush.msra.mxu0 0.0
        %289 = vmatpush.msra.mxu0 0.0
        %290 = vmatpush.msra.mxu0 0.0
        %291 = vmatpush.msra.mxu0 0.0
        %292 = vmatpush.msra.mxu0 0.0
        %293 = vmatpush.msra.mxu0 0.0
        %294 = vmatpush.msra.mxu0 0.0
        %295 = vmatpush.msra.mxu0 0.0
        %296 = vmatpush.msra.mxu0 0.0
        %297 = vmatpush.msra.mxu0 0.0
        %298 = vmatpush.msra.mxu0 0.0
        %299 = vmatpush.msra.mxu0 %v259
        %300 = vmatmul.f32.gmra.mxu0 %v251
        %v301 = vpop.f32.mrf.mxu0
        %v302 = vadd.f32 %v238, %v301
        %303 = vmatmul.f32.gmra.mxu0 %v254
        %v304 = vpop.f32.mrf.mxu0
        %v305 = vadd.f32 %v243, %v304
        %306 = vdwg.mxu0
        %v307 = vmul.f32 %v279, 0.1
        %v308 = vmul.f32 %v302, 0.1
        %v309 = vmul.f32 %v282, 0.1
        %v310 = vmul.f32 %v305, 0.1
        %v311 = vmax.f32 %v279, %v307
        %v312 = vmax.f32 %v302, %v308
        %v313 = vmax.f32 %v282, %v309
        %v314 = vmax.f32 %v305, %v310
        %s315 = scalar_lea.vmem %s1, 16
        %v316 = vld [vmem:[%s315] sm:$0xff]
        %v317 = vld [vmem:[%s315 + $0x8] sm:$0xff]
        %s318 = scalar_lea.vmem %s2, 16
        %v319 = vld [vmem:[%s318] sm:$0xff]
        %v320 = vld [vmem:[%s318 + $0x8] sm:$0xff]
        %322 = vset.pattern.permute.xlu0 0
        %323 = vperm.xlu0 %322, %v319
        %v324 = vpop.permute.xlu0 %323
        %327 = vset.pattern.permute.xlu0 0
        %328 = vperm.xlu0 %327, %v320
        %v329 = vpop.permute.xlu0 %328
        %vm331 = vcmask 130048
        %v333 = vsel %vm331, %v316, 0
        %v336 = vsel %vm331, %v317, 0
        %338 = vmatpush.msra.mxu0 0.0
        %339 = vmatpush.msra.mxu0 0.0
        %340 = vmatpush.msra.mxu0 0.0
        %341 = vmatpush.msra.mxu0 0.0
        %342 = vmatpush.msra.mxu0 0.0
        %343 = vmatpush.msra.mxu0 0.0
        %344 = vmatpush.msra.mxu0 0.0
        %345 = vmatpush.msra.mxu0 0.0
        %346 = vmatpush.msra.mxu0 0.0
        %347 = vmatpush.msra.mxu0 0.0
        %348 = vmatpush.msra.mxu0 0.0
        %349 = vmatpush.msra.mxu0 0.0
        %350 = vmatpush.msra.mxu0 0.0
        %351 = vmatpush.msra.mxu0 0.0
        %352 = vmatpush.msra.mxu0 %v313
        %353 = vmatpush.msra.mxu0 %v311
        %354 = vmatmul.f32.gmra.mxu0 %v333
        %v355 = vpop.f32.mrf.mxu0
        %v356 = vadd.f32 %v324, %v355
        %357 = vmatmul.f32.gmra.mxu0 %v336
        %v358 = vpop.f32.mrf.mxu0
        %v359 = vadd.f32 %v329, %v358
        %360 = vdwg.mxu0
        %361 = vmatpush.msra.mxu0 0.0
        %362 = vmatpush.msra.mxu0 0.0
        %363 = vmatpush.msra.mxu0 0.0
        %364 = vmatpush.msra.mxu0 0.0
        %365 = vmatpush.msra.mxu0 0.0
        %366 = vmatpush.msra.mxu0 0.0
        %367 = vmatpush.msra.mxu0 0.0
        %368 = vmatpush.msra.mxu0 0.0
        %369 = vmatpush.msra.mxu0 0.0
        %370 = vmatpush.msra.mxu0 0.0
        %371 = vmatpush.msra.mxu0 0.0
        %372 = vmatpush.msra.mxu0 0.0
        %373 = vmatpush.msra.mxu0 0.0
        %374 = vmatpush.msra.mxu0 0.0
        %375 = vmatpush.msra.mxu0 %v314
        %376 = vmatpush.msra.mxu0 %v312
        %377 = vmatmul.f32.gmra.mxu0 %v333
        %v378 = vpop.f32.mrf.mxu0
        %v379 = vadd.f32 %v324, %v378
        %380 = vmatmul.f32.gmra.mxu0 %v336
        %v381 = vpop.f32.mrf.mxu0
        %v382 = vadd.f32 %v329, %v381
        %383 = vdwg.mxu0
        %v384 = vmul.f32 %v356, 0.1
        %v385 = vmul.f32 %v379, 0.1
        %v386 = vmul.f32 %v359, 0.1
        %v387 = vmul.f32 %v382, 0.1
        %v388 = vmax.f32 %v356, %v384
        %v389 = vmax.f32 %v379, %v385
        %v390 = vmax.f32 %v359, %v386
        %v391 = vmax.f32 %v382, %v387
        %s392 = scalar_lea.vmem %s1, 32
        %v393 = vld [vmem:[%s392] sm:$0xff]
        %v394 = vld [vmem:[%s392 + $0x8] sm:$0xff]
        %s395 = scalar_lea.vmem %s2, 32
        %v396 = vld [vmem:[%s395] sm:$0xff]
        %v397 = vld [vmem:[%s395 + $0x8] sm:$0xff]
        %399 = vset.pattern.permute.xlu0 0
        %400 = vperm.xlu0 %399, %v396
        %v401 = vpop.permute.xlu0 %400
        %404 = vset.pattern.permute.xlu0 0
        %405 = vperm.xlu0 %404, %v397
        %v406 = vpop.permute.xlu0 %405
        %v409 = vsel %vm331, %v393, 0
        %v412 = vsel %vm331, %v394, 0
        %414 = vmatpush.msra.mxu0 0.0
        %415 = vmatpush.msra.mxu0 0.0
        %416 = vmatpush.msra.mxu0 0.0
        %417 = vmatpush.msra.mxu0 0.0
        %418 = vmatpush.msra.mxu0 0.0
        %419 = vmatpush.msra.mxu0 0.0
        %420 = vmatpush.msra.mxu0 0.0
        %421 = vmatpush.msra.mxu0 0.0
        %422 = vmatpush.msra.mxu0 0.0
        %423 = vmatpush.msra.mxu0 0.0
        %424 = vmatpush.msra.mxu0 0.0
        %425 = vmatpush.msra.mxu0 0.0
        %426 = vmatpush.msra.mxu0 0.0
        %427 = vmatpush.msra.mxu0 0.0
        %428 = vmatpush.msra.mxu0 %v390
        %429 = vmatpush.msra.mxu0 %v388
        %430 = vmatmul.f32.gmra.mxu0 %v409
        %v431 = vpop.f32.mrf.mxu0
        %v432 = vadd.f32 %v401, %v431
        %433 = vmatmul.f32.gmra.mxu0 %v412
        %v434 = vpop.f32.mrf.mxu0
        %v435 = vadd.f32 %v406, %v434
        %436 = vdwg.mxu0
        %437 = vmatpush.msra.mxu0 0.0
        %438 = vmatpush.msra.mxu0 0.0
        %439 = vmatpush.msra.mxu0 0.0
        %440 = vmatpush.msra.mxu0 0.0
        %441 = vmatpush.msra.mxu0 0.0
        %442 = vmatpush.msra.mxu0 0.0
        %443 = vmatpush.msra.mxu0 0.0
        %444 = vmatpush.msra.mxu0 0.0
        %445 = vmatpush.msra.mxu0 0.0
        %446 = vmatpush.msra.mxu0 0.0
        %447 = vmatpush.msra.mxu0 0.0
        %448 = vmatpush.msra.mxu0 0.0
        %449 = vmatpush.msra.mxu0 0.0
        %450 = vmatpush.msra.mxu0 0.0
        %451 = vmatpush.msra.mxu0 %v391
        %452 = vmatpush.msra.mxu0 %v389
        %453 = vmatmul.f32.gmra.mxu0 %v409
        %v454 = vpop.f32.mrf.mxu0
        %v455 = vadd.f32 %v401, %v454
        %456 = vmatmul.f32.gmra.mxu0 %v412
        %v457 = vpop.f32.mrf.mxu0
        %v458 = vadd.f32 %v406, %v457
        %459 = vdwg.mxu0
        %v460 = vmul.f32 %v432, 0.1
        %v461 = vmul.f32 %v455, 0.1
        %v462 = vmul.f32 %v435, 0.1
        %v463 = vmul.f32 %v458, 0.1
        %v464 = vmax.f32 %v432, %v460
        %v465 = vmax.f32 %v455, %v461
        %v466 = vmax.f32 %v435, %v462
        %v467 = vmax.f32 %v458, %v463
        %s468 = scalar_lea.vmem %s1, 48
        %v469 = vld [vmem:[%s468] sm:$0xff]
        %v470 = vld [vmem:[%s468 + $0x8] sm:$0xff]
        %s471 = scalar_lea.vmem %s2, 48
        %v472 = vld [vmem:[%s471] sm:$0xff]
        %v473 = vld [vmem:[%s471 + $0x8] sm:$0xff]
        %475 = vset.pattern.permute.xlu0 0
        %476 = vperm.xlu0 %475, %v472
        %v477 = vpop.permute.xlu0 %476
        %480 = vset.pattern.permute.xlu0 0
        %481 = vperm.xlu0 %480, %v473
        %v482 = vpop.permute.xlu0 %481
        %v485 = vsel %vm331, %v469, 0
        %v488 = vsel %vm331, %v470, 0
        %490 = vmatpush.msra.mxu0 0.0
        %491 = vmatpush.msra.mxu0 0.0
        %492 = vmatpush.msra.mxu0 0.0
        %493 = vmatpush.msra.mxu0 0.0
        %494 = vmatpush.msra.mxu0 0.0
        %495 = vmatpush.msra.mxu0 0.0
        %496 = vmatpush.msra.mxu0 0.0
        %497 = vmatpush.msra.mxu0 0.0
        %498 = vmatpush.msra.mxu0 0.0
        %499 = vmatpush.msra.mxu0 0.0
        %500 = vmatpush.msra.mxu0 0.0
        %501 = vmatpush.msra.mxu0 0.0
        %502 = vmatpush.msra.mxu0 0.0
        %503 = vmatpush.msra.mxu0 0.0
        %504 = vmatpush.msra.mxu0 %v466
        %505 = vmatpush.msra.mxu0 %v464
        %506 = vmatmul.f32.gmra.mxu0 %v485
        %v507 = vpop.f32.mrf.mxu0
        %v508 = vadd.f32 %v477, %v507
        %509 = vmatmul.f32.gmra.mxu0 %v488
        %v510 = vpop.f32.mrf.mxu0
        %v511 = vadd.f32 %v482, %v510
        %512 = vdwg.mxu0
        %513 = vmatpush.msra.mxu0 0.0
        %514 = vmatpush.msra.mxu0 0.0
        %515 = vmatpush.msra.mxu0 0.0
        %516 = vmatpush.msra.mxu0 0.0
        %517 = vmatpush.msra.mxu0 0.0
        %518 = vmatpush.msra.mxu0 0.0
        %519 = vmatpush.msra.mxu0 0.0
        %520 = vmatpush.msra.mxu0 0.0
        %521 = vmatpush.msra.mxu0 0.0
        %522 = vmatpush.msra.mxu0 0.0
        %523 = vmatpush.msra.mxu0 0.0
        %524 = vmatpush.msra.mxu0 0.0
        %525 = vmatpush.msra.mxu0 0.0
        %526 = vmatpush.msra.mxu0 0.0
        %527 = vmatpush.msra.mxu0 %v467
        %528 = vmatpush.msra.mxu0 %v465
        %529 = vmatmul.f32.gmra.mxu0 %v485
        %v530 = vpop.f32.mrf.mxu0
        %v531 = vadd.f32 %v477, %v530
        %532 = vmatmul.f32.gmra.mxu0 %v488
        %v533 = vpop.f32.mrf.mxu0
        %v534 = vadd.f32 %v482, %v533
        %535 = vdwg.mxu0
        %v536 = vmul.f32 %v508, 0.1
        %v537 = vmul.f32 %v531, 0.1
        %v538 = vmul.f32 %v511, 0.1
        %v539 = vmul.f32 %v534, 0.1
        %v540 = vmax.f32 %v508, %v536
        %v541 = vmax.f32 %v531, %v537
        %v542 = vmax.f32 %v511, %v538
        %v543 = vmax.f32 %v534, %v539
        %v546 = vrot.slane %v541, 4
        %v547 = vsel %vm256, %v540, %v546
        %549 = vst [vmem:[%s219] sm:$0xff] %v547
        %s550 = scalar_lea.vmem %s1, 64
        %v551 = vld [vmem:[%s550] sm:$0xff]
        %v552 = vld [vmem:[%s550 + $0x8] sm:$0xff]
        %s553 = scalar_lea.vmem %s2, 64
        %v554 = vld [vmem:[%s553] sm:$0xff]
        %v555 = vld [vmem:[%s553 + $0x8] sm:$0xff]
        %557 = vset.pattern.permute.xlu0 0
        %558 = vperm.xlu0 %557, %v554
        %v559 = vpop.permute.xlu0 %558
        %562 = vset.pattern.permute.xlu0 0
        %563 = vperm.xlu0 %562, %v555
        %v564 = vpop.permute.xlu0 %563
        %v567 = vsel %vm331, %v551, 0
        %v570 = vsel %vm331, %v552, 0
        %572 = vmatpush.msra.mxu0 0.0
        %573 = vmatpush.msra.mxu0 0.0
        %574 = vmatpush.msra.mxu0 0.0
        %575 = vmatpush.msra.mxu0 0.0
        %576 = vmatpush.msra.mxu0 0.0
        %577 = vmatpush.msra.mxu0 0.0
        %578 = vmatpush.msra.mxu0 0.0
        %579 = vmatpush.msra.mxu0 0.0
        %580 = vmatpush.msra.mxu0 0.0
        %581 = vmatpush.msra.mxu0 0.0
        %582 = vmatpush.msra.mxu0 0.0
        %583 = vmatpush.msra.mxu0 0.0
        %584 = vmatpush.msra.mxu0 0.0
        %585 = vmatpush.msra.mxu0 0.0
        %586 = vmatpush.msra.mxu0 %v542
        %587 = vmatpush.msra.mxu0 %v540
        %588 = vmatmul.f32.gmra.mxu0 %v567
        %v589 = vpop.f32.mrf.mxu0
        %v590 = vadd.f32 %v559, %v589
        %591 = vmatmul.f32.gmra.mxu0 %v570
        %v592 = vpop.f32.mrf.mxu0
        %v593 = vadd.f32 %v564, %v592
        %594 = vdwg.mxu0
        %595 = vmatpush.msra.mxu0 0.0
        %596 = vmatpush.msra.mxu0 0.0
        %597 = vmatpush.msra.mxu0 0.0
        %598 = vmatpush.msra.mxu0 0.0
        %599 = vmatpush.msra.mxu0 0.0
        %600 = vmatpush.msra.mxu0 0.0
        %601 = vmatpush.msra.mxu0 0.0
        %602 = vmatpush.msra.mxu0 0.0
        %603 = vmatpush.msra.mxu0 0.0
        %604 = vmatpush.msra.mxu0 0.0
        %605 = vmatpush.msra.mxu0 0.0
        %606 = vmatpush.msra.mxu0 0.0
        %607 = vmatpush.msra.mxu0 0.0
        %608 = vmatpush.msra.mxu0 0.0
        %609 = vmatpush.msra.mxu0 %v543
        %610 = vmatpush.msra.mxu0 %v541
        %611 = vmatmul.f32.gmra.mxu0 %v567
        %v612 = vpop.f32.mrf.mxu0
        %v613 = vadd.f32 %v559, %v612
        %614 = vmatmul.f32.gmra.mxu0 %v570
        %v615 = vpop.f32.mrf.mxu0
        %v616 = vadd.f32 %v564, %v615
        %617 = vdwg.mxu0
        %v618 = vmul.f32 %v590, 0.1
        %v619 = vmul.f32 %v613, 0.1
        %v620 = vmul.f32 %v593, 0.1
        %v621 = vmul.f32 %v616, 0.1
        %v622 = vmax.f32 %v590, %v618
        %v623 = vmax.f32 %v613, %v619
        %v624 = vmax.f32 %v593, %v620
        %v625 = vmax.f32 %v616, %v621
        %s626 = scalar_lea.vmem %s1, 80
        %v627 = vld [vmem:[%s626] sm:$0xff]
        %v628 = vld [vmem:[%s626 + $0x8] sm:$0xff]
        %s629 = scalar_lea.vmem %s2, 80
        %v630 = vld [vmem:[%s629] sm:$0xff]
        %v631 = vld [vmem:[%s629 + $0x8] sm:$0xff]
        %633 = vset.pattern.permute.xlu0 0
        %634 = vperm.xlu0 %633, %v630
        %v635 = vpop.permute.xlu0 %634
        %638 = vset.pattern.permute.xlu0 0
        %639 = vperm.xlu0 %638, %v631
        %v640 = vpop.permute.xlu0 %639
        %v643 = vsel %vm331, %v627, 0
        %v646 = vsel %vm331, %v628, 0
        %648 = vmatpush.msra.mxu0 0.0
        %649 = vmatpush.msra.mxu0 0.0
        %650 = vmatpush.msra.mxu0 0.0
        %651 = vmatpush.msra.mxu0 0.0
        %652 = vmatpush.msra.mxu0 0.0
        %653 = vmatpush.msra.mxu0 0.0
        %654 = vmatpush.msra.mxu0 0.0
        %655 = vmatpush.msra.mxu0 0.0
        %656 = vmatpush.msra.mxu0 0.0
        %657 = vmatpush.msra.mxu0 0.0
        %658 = vmatpush.msra.mxu0 0.0
        %659 = vmatpush.msra.mxu0 0.0
        %660 = vmatpush.msra.mxu0 0.0
        %661 = vmatpush.msra.mxu0 0.0
        %662 = vmatpush.msra.mxu0 %v624
        %663 = vmatpush.msra.mxu0 %v622
        %664 = vmatmul.f32.gmra.mxu0 %v643
        %v665 = vpop.f32.mrf.mxu0
        %v666 = vadd.f32 %v635, %v665
        %667 = vmatmul.f32.gmra.mxu0 %v646
        %v668 = vpop.f32.mrf.mxu0
        %v669 = vadd.f32 %v640, %v668
        %670 = vdwg.mxu0
        %671 = vmatpush.msra.mxu0 0.0
        %672 = vmatpush.msra.mxu0 0.0
        %673 = vmatpush.msra.mxu0 0.0
        %674 = vmatpush.msra.mxu0 0.0
        %675 = vmatpush.msra.mxu0 0.0
        %676 = vmatpush.msra.mxu0 0.0
        %677 = vmatpush.msra.mxu0 0.0
        %678 = vmatpush.msra.mxu0 0.0
        %679 = vmatpush.msra.mxu0 0.0
        %680 = vmatpush.msra.mxu0 0.0
        %681 = vmatpush.msra.mxu0 0.0
        %682 = vmatpush.msra.mxu0 0.0
        %683 = vmatpush.msra.mxu0 0.0
        %684 = vmatpush.msra.mxu0 0.0
        %685 = vmatpush.msra.mxu0 %v625
        %686 = vmatpush.msra.mxu0 %v623
        %687 = vmatmul.f32.gmra.mxu0 %v643
        %v688 = vpop.f32.mrf.mxu0
        %v689 = vadd.f32 %v635, %v688
        %690 = vmatmul.f32.gmra.mxu0 %v646
        %v691 = vpop.f32.mrf.mxu0
        %v692 = vadd.f32 %v640, %v691
        %693 = vdwg.mxu0
        %v694 = vmul.f32 %v666, 0.1
        %v695 = vmul.f32 %v689, 0.1
        %v696 = vmul.f32 %v669, 0.1
        %v697 = vmul.f32 %v692, 0.1
        %v698 = vmax.f32 %v666, %v694
        %v699 = vmax.f32 %v689, %v695
        %v700 = vmax.f32 %v669, %v696
        %v701 = vmax.f32 %v692, %v697
        %s702 = scalar_lea.vmem %s1, 96
        %v703 = vld [vmem:[%s702] sm:$0xff]
        %v704 = vld [vmem:[%s702 + $0x8] sm:$0xff]
        %s705 = scalar_lea.vmem %s2, 96
        %v706 = vld [vmem:[%s705] sm:$0xff]
        %v707 = vld [vmem:[%s705 + $0x8] sm:$0xff]
        %709 = vset.pattern.permute.xlu0 0
        %710 = vperm.xlu0 %709, %v706
        %v711 = vpop.permute.xlu0 %710
        %714 = vset.pattern.permute.xlu0 0
        %715 = vperm.xlu0 %714, %v707
        %v716 = vpop.permute.xlu0 %715
        %v719 = vsel %vm331, %v703, 0
        %v722 = vsel %vm331, %v704, 0
        %724 = vmatpush.msra.mxu0 0.0
        %725 = vmatpush.msra.mxu0 0.0
        %726 = vmatpush.msra.mxu0 0.0
        %727 = vmatpush.msra.mxu0 0.0
        %728 = vmatpush.msra.mxu0 0.0
        %729 = vmatpush.msra.mxu0 0.0
        %730 = vmatpush.msra.mxu0 0.0
        %731 = vmatpush.msra.mxu0 0.0
        %732 = vmatpush.msra.mxu0 0.0
        %733 = vmatpush.msra.mxu0 0.0
        %734 = vmatpush.msra.mxu0 0.0
        %735 = vmatpush.msra.mxu0 0.0
        %736 = vmatpush.msra.mxu0 0.0
        %737 = vmatpush.msra.mxu0 0.0
        %738 = vmatpush.msra.mxu0 %v700
        %739 = vmatpush.msra.mxu0 %v698
        %740 = vmatmul.f32.gmra.mxu0 %v719
        %v741 = vpop.f32.mrf.mxu0
        %v742 = vadd.f32 %v711, %v741
        %743 = vmatmul.f32.gmra.mxu0 %v722
        %v744 = vpop.f32.mrf.mxu0
        %v745 = vadd.f32 %v716, %v744
        %746 = vdwg.mxu0
        %747 = vmatpush.msra.mxu0 0.0
        %748 = vmatpush.msra.mxu0 0.0
        %749 = vmatpush.msra.mxu0 0.0
        %750 = vmatpush.msra.mxu0 0.0
        %751 = vmatpush.msra.mxu0 0.0
        %752 = vmatpush.msra.mxu0 0.0
        %753 = vmatpush.msra.mxu0 0.0
        %754 = vmatpush.msra.mxu0 0.0
        %755 = vmatpush.msra.mxu0 0.0
        %756 = vmatpush.msra.mxu0 0.0
        %757 = vmatpush.msra.mxu0 0.0
        %758 = vmatpush.msra.mxu0 0.0
        %759 = vmatpush.msra.mxu0 0.0
        %760 = vmatpush.msra.mxu0 0.0
        %761 = vmatpush.msra.mxu0 %v701
        %762 = vmatpush.msra.mxu0 %v699
        %763 = vmatmul.f32.gmra.mxu0 %v719
        %v764 = vpop.f32.mrf.mxu0
        %v765 = vadd.f32 %v711, %v764
        %766 = vmatmul.f32.gmra.mxu0 %v722
        %v767 = vpop.f32.mrf.mxu0
        %v768 = vadd.f32 %v716, %v767
        %769 = vdwg.mxu0
        %v770 = vmul.f32 %v742, 0.1
        %v771 = vmul.f32 %v765, 0.1
        %v772 = vmul.f32 %v745, 0.1
        %v773 = vmul.f32 %v768, 0.1
        %v774 = vmax.f32 %v742, %v770
        %v775 = vmax.f32 %v765, %v771
        %v776 = vmax.f32 %v745, %v772
        %v777 = vmax.f32 %v768, %v773
        %s778 = scalar_lea.vmem %s1, 112
        %v779 = vld [vmem:[%s778] sm:$0xff]
        %v780 = vld [vmem:[%s778 + $0x8] sm:$0xff]
        %s781 = scalar_lea.vmem %s2, 112
        %v782 = vld [vmem:[%s781] sm:$0xff]
        %v783 = vld [vmem:[%s781 + $0x8] sm:$0xff]
        %785 = vset.pattern.permute.xlu0 0
        %786 = vperm.xlu0 %785, %v782
        %v787 = vpop.permute.xlu0 %786
        %790 = vset.pattern.permute.xlu0 0
        %791 = vperm.xlu0 %790, %v783
        %v792 = vpop.permute.xlu0 %791
        %v794 = vsel %vm331, %v779, 0
        %v797 = vsel %vm331, %v780, 0
        %799 = vmatpush.msra.mxu0 0.0
        %800 = vmatpush.msra.mxu0 0.0
        %801 = vmatpush.msra.mxu0 0.0
        %802 = vmatpush.msra.mxu0 0.0
        %803 = vmatpush.msra.mxu0 0.0
        %804 = vmatpush.msra.mxu0 0.0
        %805 = vmatpush.msra.mxu0 0.0
        %806 = vmatpush.msra.mxu0 0.0
        %807 = vmatpush.msra.mxu0 0.0
        %808 = vmatpush.msra.mxu0 0.0
        %809 = vmatpush.msra.mxu0 0.0
        %810 = vmatpush.msra.mxu0 0.0
        %811 = vmatpush.msra.mxu0 0.0
        %812 = vmatpush.msra.mxu0 0.0
        %813 = vmatpush.msra.mxu0 %v776
        %814 = vmatpush.msra.mxu0 %v774
        %815 = vmatmul.f32.gmra.mxu0 %v794
        %v816 = vpop.f32.mrf.mxu0
        %v817 = vadd.f32 %v787, %v816
        %818 = vmatmul.f32.gmra.mxu0 %v797
        %v819 = vpop.f32.mrf.mxu0
        %820 = vdwg.mxu0
        %821 = vmatpush.msra.mxu0 0.0
        %822 = vmatpush.msra.mxu0 0.0
        %823 = vmatpush.msra.mxu0 0.0
        %824 = vmatpush.msra.mxu0 0.0
        %825 = vmatpush.msra.mxu0 0.0
        %826 = vmatpush.msra.mxu0 0.0
        %827 = vmatpush.msra.mxu0 0.0
        %828 = vmatpush.msra.mxu0 0.0
        %829 = vmatpush.msra.mxu0 0.0
        %830 = vmatpush.msra.mxu0 0.0
        %831 = vmatpush.msra.mxu0 0.0
        %832 = vmatpush.msra.mxu0 0.0
        %833 = vmatpush.msra.mxu0 0.0
        %834 = vmatpush.msra.mxu0 0.0
        %835 = vmatpush.msra.mxu0 %v777
        %836 = vmatpush.msra.mxu0 %v775
        %837 = vmatmul.f32.gmra.mxu0 %v794
        %v838 = vpop.f32.mrf.mxu0
        %v839 = vadd.f32 %v787, %v838
        %840 = vmatmul.f32.gmra.mxu0 %v797
        %v841 = vpop.f32.mrf.mxu0
        %842 = vdwg.mxu0
        %v843 = vmul.f32 %v817, 0.1
        %v844 = vmul.f32 %v839, 0.1
        %v845 = vmax.f32 %v817, %v843
        %v846 = vmax.f32 %v839, %v844
        %v849 = vrot.slane %v846, 4
        %v850 = vsel %vm256, %v845, %v849
        %852 = vst [vmem:[%s226] sm:$0xff] %v850
        %s853 = sand.u32 %s101, 1
        %s854 = scalar_lea.sflag [#allocation4], %s853
        %s855 = sand.u32 %s101, 1
        %s856 = smul.addr %s855, 8
        %s857 = scalar_lea.vmem [#allocation5], %s856
        %s858 = sand.u32 %s127, 1
        %s859 = scalar_lea.sflag [#allocation7], %s858
        %s860 = sand.u32 %s127, 1
        %s861 = smul.addr %s860, 8
        %s862 = scalar_lea.vmem [#allocation6], %s861
        // Predicated region
        $region37: #{feature_extract_vae_forward.1} parent=31 // pred_check
          %p863 = pneg %p111
        $region38: #{feature_extract_vae_forward.1} parent=31 // pred_check_branch
          %865 = sbr.rel (%p863) target = $region40
        $region39: #{feature_extract_vae_forward.1} parent=31 // pred_region
          %s866 = smul.u32 2, %s25
          %868 = vsyncadd %s854, 0
          %s869 = smul.addr %s866, 4
          %s870 = scalar_lea.hbm %s3, %s869
          %s872 = sshll.u32 %s857, 4
          %s873 = int_to_ptr.vmem [resolvable:$true] %s872
          %s874 = sshll.u32 %s870, 4
          %s875 = int_to_ptr.hbm [resolvable:$true] %s874
          %877 = dma.vmem_to_hbm [thread:$0]  %s873, 128, %s875, %s854
        $region40: #{feature_extract_vae_forward.1} parent=31 // pred_fallthru
          _
        // Predicated region
        $region41: #{feature_extract_vae_forward.1} parent=31 // pred_check
          %p878 = pneg %p137
        $region42: #{feature_extract_vae_forward.1} parent=31 // pred_check_branch
          %880 = sbr.rel (%p878) target = $region44
        $region43: #{feature_extract_vae_forward.1} parent=31 // pred_region
          %s881 = smul.u32 2, %s25
          %883 = vsyncadd %s859, 0
          %s884 = smul.addr %s881, 4
          %s885 = scalar_lea.hbm %s4, %s884
          %s887 = sshll.u32 %s862, 4
          %s888 = int_to_ptr.vmem [resolvable:$true] %s887
          %s889 = sshll.u32 %s885, 4
          %s890 = int_to_ptr.hbm [resolvable:$true] %s889
          %892 = dma.vmem_to_hbm [thread:$0]  %s888, 128, %s890, %s859
        $region44: #{feature_extract_vae_forward.1} parent=31 // pred_fallthru
          _
      $region32: #{feature_extract_vae_forward.1} parent=5 // pred_fallthru
        _
      %p893 = scmp.le.s32.totalorder 2, %s20
      // Predicated region
      $region45: #{feature_extract_vae_forward.1} parent=5 // pred_check
        %p894 = pneg %p893
      $region46: #{feature_extract_vae_forward.1} parent=5 // pred_check_branch
        %896 = sbr.rel (%p894) target = $region48
      $region47: #{feature_extract_vae_forward.1} parent=5 // pred_region
        %s897 = ssub.s32 %s20, 2
        // Predicated region
        $region49: #{feature_extract_vae_forward.1} parent=47 // pred_check
          %p898 = pneg %p117
        $region50: #{feature_extract_vae_forward.1} parent=47 // pred_check_branch
          %900 = sbr.rel (%p898) target = $region52
        $region51: #{feature_extract_vae_forward.1} parent=47 // pred_region
          %s901 = sand.u32 %s102, 1
          %s902 = scalar_lea.sflag [#allocation4], %s901
          %s903 = sand.u32 %s102, 1
          %s904 = smul.addr %s903, 8
          %s905 = scalar_lea.vmem [#allocation5], %s904
          %907 = dma.done %s902, 128
        $region52: #{feature_extract_vae_forward.1} parent=47 // pred_fallthru
          _
        // Predicated region
        $region53: #{feature_extract_vae_forward.1} parent=47 // pred_check
          %p908 = pneg %p143
        $region54: #{feature_extract_vae_forward.1} parent=47 // pred_check_branch
          %910 = sbr.rel (%p908) target = $region56
        $region55: #{feature_extract_vae_forward.1} parent=47 // pred_region
          %s911 = sand.u32 %s128, 1
          %s912 = scalar_lea.sflag [#allocation7], %s911
          %s913 = sand.u32 %s128, 1
          %s914 = smul.addr %s913, 8
          %s915 = scalar_lea.vmem [#allocation6], %s914
          %917 = dma.done %s912, 128
        $region56: #{feature_extract_vae_forward.1} parent=47 // pred_fallthru
          _
      $region48: #{feature_extract_vae_forward.1} parent=5 // pred_fallthru
        _
    $region6: #{feature_extract_vae_forward.1} parent=1 // loop_footer
      %s24 = sadd.s32 1, %s20
    $region7: #{feature_extract_vae_forward.1} parent=1 // loop_footer_branch
      %19 = sbr.rel target = $region3
    $region8: #{feature_extract_vae_forward.1} parent=1 // loop_exit
      _
    %918 = vsyncpa [#allocation3], 1
    %s919 = scalar_lea.sflag [#allocation3], 1
    %920 = vsyncpa %s919, 1
    %921 = vsyncpa [#allocation4], 1
    %s922 = scalar_lea.sflag [#allocation4], 1
    %923 = vsyncpa %s922, 1
    %924 = vsyncpa [#allocation7], 1
    %s925 = scalar_lea.sflag [#allocation7], 1
    %926 = vsyncpa %s925, 1

</llo_original>
